<compile_context>
chip_gen: v5e
topology: v5e:2x2
jax: 0.10.0
libtpu: 0.0.40
codegen_flags: <defaults>
</compile_context>

<pallas_src>
import functools

import jax
import jax.numpy as jnp
from jax import lax
from jax.experimental import pallas as pl
from jax.experimental.pallas import tpu as pltpu


def _round_up(x, m):
    return ((x + m - 1) // m) * m


# --------------------------------------------------------------------------
# Pass 1: row-wise L2 normalization (runs once per row, not once per tile).
# --------------------------------------------------------------------------
def _l2_normalize_kernel(f_ref, o_ref):
    x = f_ref[...].astype(jnp.float32)
    nrm2 = jnp.sum(x * x, axis=1, keepdims=True)
    # torch F.normalize(p=2, eps=1e-12): x / max(||x||, 1e-12)
    o_ref[...] = (x * lax.rsqrt(jnp.maximum(nrm2, 1e-24))).astype(o_ref.dtype)


# --------------------------------------------------------------------------
# Pass 2: tiled, symmetry-reduced gram accumulation.
# --------------------------------------------------------------------------
def _fold_sublanes(x):
    # (tm, tn) -> (8, tn) partial sum using only sublane-group VALU adds
    # (reshape keeps the native (8, 128) tiling, so no relayout / XLU trees).
    m, n = x.shape
    return jnp.sum(x.reshape(m // 8, 8, n), axis=0)


def _pes_tiles_kernel(n_ref, fr_ref, fc_ref, lr_ref, lc_ref, out_ref,
                      pos_s_acc, neg_s_acc, pos_c_acc, base_acc,
                      *, nb, block):
    i = pl.program_id(0)                    # row block
    j = pl.program_id(1)                    # circular column offset
    last_j = pl.num_programs(1) - 1
    c = (i + j) % nb                        # actual column block index
    n = n_ref[0]                            # number of valid rows (runtime)

    @pl.when(j == 0)
    def _init():
        pos_s_acc[...] = jnp.zeros_like(pos_s_acc)
        neg_s_acc[...] = jnp.zeros_like(neg_s_acc)
        pos_c_acc[...] = jnp.zeros_like(pos_c_acc)
        base_acc[0] = 0.0

    # Tile weight: diagonal block once; wrap block (even nb) is visited from
    # both sides so weight 1; every other off-diagonal block stands in for its
    # mirror image -> weight 2.
    if nb % 2 == 0:
        w = jnp.where(jnp.logical_or(j == 0, j * 2 == nb), 1.0, 2.0)
    else:
        w = jnp.where(j == 0, 1.0, 2.0)
    w = w.astype(jnp.float32)

    # MXU matmul over the lane (D) axis in the stored (already normalized)
    # dtype; f32 accumulate.  Padded rows are exact zeros -> contribute 0.
    dot = lax.dot_general(
        fr_ref[...], fc_ref[...],
        dimension_numbers=(((1,), (1,)), ((), ())),
        preferred_element_type=jnp.float32)                    # (tm, tn)

    # Label masks from broadcast compares of (tm,1) / (1,tn) vectors.  Padded
    # rows carry unique sentinel labels, so they never match anything except
    # themselves on the diagonal, which the off-diagonal mask removes.
    same = lr_ref[...] == lc_ref[...]                          # (tm, tn) bool
    ri = i * block + lax.broadcasted_iota(jnp.int32, (block, 1), 0)
    cj = c * block + lax.broadcasted_iota(jnp.int32, (1, block), 1)
    same_offdiag = jnp.logical_and(same, ri != cj)

    zero = jnp.float32(0.0)
    one = jnp.float32(1.0)
    pos_s_acc[...] += w * _fold_sublanes(jnp.where(same_offdiag, dot, zero))
    neg_s_acc[...] += w * _fold_sublanes(jnp.where(same, zero, dot))
    pos_c_acc[...] += w * _fold_sublanes(jnp.where(same_offdiag, one, zero))

    # Label-independent pair counts via scalar index arithmetic only.
    rows_f = jnp.clip(n - i * block, 0, block).astype(jnp.float32)
    cols_f = jnp.clip(n - c * block, 0, block).astype(jnp.float32)
    base_acc[0] += w * rows_f * cols_f - jnp.where(j == 0, rows_f, 0.0)

    @pl.when(j == last_j)
    def _finalize():
        pos_s = jnp.sum(pos_s_acc[...])
        neg_s = jnp.sum(neg_s_acc[...])
        pos_c = jnp.sum(pos_c_acc[...])
        out_ref[0, 0] = pos_s
        out_ref[0, 1] = neg_s
        out_ref[0, 2] = pos_c
        out_ref[0, 3] = base_acc[0] - pos_c   # (n^2 - n) partial - pos count


def pes_loss(features, labels, lamda=0.5, block=None):
    """features: (N, D) f32/bf16 array; labels: (N,) ints. Returns scalar f32 loss."""
    n, d = features.shape
    if block is None:
        # 256 is MXU/lane friendly on v5e/v6e/v7x; sweep to 512 on v6e if VMEM
        # allows (v7x has half the VMEM -- keep 256 there).
        block = min(256, _round_up(max(n, 1), 128))
    n_pad = _round_up(n, block)
    nb = n_pad // block

    feat = features                           # keep native dtype (bf16 stays bf16)
    lab = labels.astype(jnp.int32)
    if n_pad != n:
        feat = jnp.pad(feat, ((0, n_pad - n), (0, 0)))
        # Unique, strongly negative sentinels so padded rows match nothing
        # (including each other) in the label-equality mask.
        sent = jnp.iinfo(jnp.int32).min + jnp.arange(n_pad - n, dtype=jnp.int32)
        lab = jnp.concatenate([lab, sent])

    # ---- Pass 1: normalize each row exactly once. ----
    feat_n = pl.pallas_call(
        _l2_normalize_kernel,
        out_shape=jax.ShapeDtypeStruct((n_pad, d), feat.dtype),
        grid=(nb,),
        in_specs=[pl.BlockSpec((block, d), lambda i: (i, 0))],
        out_specs=pl.BlockSpec((block, d), lambda i: (i, 0)),
        compiler_params=pltpu.CompilerParams(dimension_semantics=("parallel",)),
    )(feat)

    lab_rows = lab.reshape(n_pad, 1)          # labels for the row block
    lab_cols = lab.reshape(1, n_pad)          # labels for the col block
    n_arr = jnp.array([n], dtype=jnp.int32)   # runtime scalar: no recompile per ragged n

    kernel = functools.partial(_pes_tiles_kernel, nb=nb, block=block)
    grid = (nb, nb // 2 + 1)

    parts = pl.pallas_call(
        kernel,
        out_shape=jax.ShapeDtypeStruct((nb, 4), jnp.float32),
        grid_spec=pltpu.PrefetchScalarGridSpec(
            num_scalar_prefetch=1,
            grid=grid,
            in_specs=[
                pl.BlockSpec((block, d), lambda i, j, n_s: (i, 0)),             # row feats
                pl.BlockSpec((block, d), lambda i, j, n_s: ((i + j) % nb, 0)),  # col feats
                pl.BlockSpec((block, 1), lambda i, j, n_s: (i, 0)),             # row labels
                pl.BlockSpec((1, block), lambda i, j, n_s: (0, (i + j) % nb)),  # col labels
            ],
            out_specs=pl.BlockSpec((1, 4), lambda i, j, n_s: (i, 0),
                                   memory_space=pltpu.MemorySpace.SMEM),
            scratch_shapes=[
                pltpu.VMEM((8, block), jnp.float32),   # pos-sum vector accumulator
                pltpu.VMEM((8, block), jnp.float32),   # neg-sum vector accumulator
                pltpu.VMEM((8, block), jnp.float32),   # pos-count vector accumulator
                pltpu.SMEM((1,), jnp.float32),         # valid-pair-count base
            ],
        ),
        # Row-block axis is independent across i (per-i partial outputs) ->
        # "parallel" lets v7x megacore split it; inner circular axis carries
        # the accumulators -> "arbitrary".
        compiler_params=pltpu.CompilerParams(
            dimension_semantics=("parallel", "arbitrary")),
    )(n_arr, feat_n, feat_n, lab_rows, lab_cols)

    # Tiny final reduce + loss formula in the wrapper.
    sums = jnp.sum(parts, axis=0)
    pos_mean = sums[0] / (sums[2] + 1e-6)
    neg_mean = sums[1] / (sums[3] + 1e-6)
    return 1.0 - pos_mean + lamda * (1.0 + neg_mean)


def _pes_loss_ref(features, labels, lamda=0.5):
    # Pure-JAX reference mirroring the PyTorch forward.
    f = features.astype(jnp.float32)
    f = f / jnp.maximum(jnp.linalg.norm(f, axis=1, keepdims=True), 1e-12)
    lab = labels[:, None]
    mask = lab == lab.T
    eye = jnp.eye(mask.shape[0], dtype=bool)
    mask_pos = jnp.where(mask & ~eye, 1.0, 0.0)
    mask_neg = jnp.where(~mask, 1.0, 0.0)
    dot = f @ f.T
    pos = jnp.sum(mask_pos * dot) / (jnp.sum(mask_pos) + 1e-6)
    neg = jnp.sum(mask_neg * dot) / (jnp.sum(mask_neg) + 1e-6)
    return 1.0 - pos + lamda * (1.0 + neg)


if __name__ == "__main__":
    key = jax.random.PRNGKey(0)
    kf, kl, kf2, kl2 = jax.random.split(key, 4)

    # Small shape consistent with the module: batch of 8 embeddings, dim 32.
    N, D = 8, 32
    features = jax.random.normal(kf, (N, D), dtype=jnp.float32)
    labels = jax.random.randint(kl, (N,), 0, 3, dtype=jnp.int32)

    loss = jax.block_until_ready(pes_loss(features, labels, lamda=0.5))
    ref = _pes_loss_ref(features, labels, lamda=0.5)
    assert jnp.allclose(loss, ref, atol=5e-5, rtol=5e-5), (loss, ref)

    # Ragged, multi-tile shape to exercise padding + the circular (i, j) grid.
    N2, D2 = 300, 64
    features2 = jax.random.normal(kf2, (N2, D2), dtype=jnp.float32)
    labels2 = jax.random.randint(kl2, (N2,), 0, 6, dtype=jnp.int32)

    loss2 = jax.block_until_ready(pes_loss(features2, labels2, lamda=0.5))
    ref2 = _pes_loss_ref(features2, labels2, lamda=0.5)
    assert jnp.allclose(loss2, ref2, atol=5e-5, rtol=5e-5), (loss2, ref2)

    # bf16 inputs: normalized bf16 goes straight to the MXU (looser tolerance).
    loss3 = jax.block_until_ready(
        pes_loss(features2.astype(jnp.bfloat16), labels2, lamda=0.5))
    assert jnp.allclose(loss3, ref2, atol=1e-2, rtol=1e-2), (loss3, ref2)

    print("KERNEL_OK")
</pallas_src>

<mosaic_0001>
module attributes {stable_mosaic.version = 11 : i64} {
  func.func @_l2_normalize_kernel(%arg0: i32, %arg1: memref<128x32xf32, #tpu.memory_space<vmem>>, %arg2: memref<128x32xf32, #tpu.memory_space<vmem>>) attributes {dimension_semantics = [#tpu.dimension_semantics<parallel>], iteration_bounds = array<i64: 1>, scalar_prefetch = 0 : i64, scratch_operands = 0 : i64, tpu.core_type = #tpu.core_type<tc>, window_params = [{transform_indices = @transform_0, window_bounds = array<i64: 128, 32>}, {transform_indices = @transform_1, window_bounds = array<i64: 128, 32>}]} {
    %c0 = arith.constant 0 : index
    %c0_0 = arith.constant 0 : index
    %0 = vector.load %arg1[%c0, %c0_0] : memref<128x32xf32, #tpu.memory_space<vmem>>, vector<128x32xf32>
    %1 = arith.mulf %0, %0 : vector<128x32xf32>
    %cst = arith.constant dense<0.000000e+00> : vector<128xf32>
    %2 = vector.multi_reduction <add>, %1, %cst [1] : vector<128x32xf32> to vector<128xf32>
    %3 = vector.shape_cast %2 : vector<128xf32> to vector<128x1xf32>
    %cst_1 = arith.constant 1.000000e-24 : f32
    %4 = vector.broadcast %cst_1 : f32 to vector<128x1xf32>
    %5 = arith.maximumf %3, %4 : vector<128x1xf32>
    %6 = math.rsqrt %5 : vector<128x1xf32>
    %7 = vector.broadcast %6 : vector<128x1xf32> to vector<128x32xf32>
    %8 = arith.mulf %0, %7 : vector<128x32xf32>
    %c0_2 = arith.constant 0 : index
    %c0_3 = arith.constant 0 : index
    %9 = vector.load %arg2[%c0_2, %c0_3] : memref<128x32xf32, #tpu.memory_space<vmem>>, vector<128x32xf32>
    tpu.vector_store %arg2[%c0_2, %c0_3], %8 {strides = array<i32>} : memref<128x32xf32, #tpu.memory_space<vmem>>, vector<128x32xf32>,
    return
  }
  func.func @transform_0(%arg0: i32) -> (i32, i32) {
    %c0_i32 = arith.constant 0 : i32
    %c0_i32_0 = arith.constant 0 : i32
    return %arg0, %c0_i32 : i32, i32
  }
  func.func @transform_1(%arg0: i32) -> (i32, i32) {
    %c0_i32 = arith.constant 0 : i32
    %c0_i32_0 = arith.constant 0 : i32
    return %arg0, %c0_i32 : i32, i32
  }
}

</mosaic_0001>

<llo_original>
// kernel: tpu_custom_call.1
$region0: #{tpu_custom_call.1}
  #allocation0 [shape = 'u32[]', space=smem, size = 0x4, offset = 0x4, fixed_abs, tag = 'smem constant byte address 0x4 - core index']
  #allocation1 [shape = 'u32[72,128]{1,0:T(1,128)}', space=vmem, size = 0x9000, scoped, tag = 'internal scratch']
  %s0 = inlined_call_operand.vmem [shape: f32[128,32], index: 0, kind: input, shape index: {}]
  %s1 = inlined_call_operand.vmem [shape: f32[128,32], index: 1, kind: output, shape index: {}]
  %s2 = sld [smem:[#allocation0]]
  $region14: #{tpu_custom_call.1} parent=0
    _
  %s4 = ssub.s32 1, %s2
  %s5 = scalar_select 0, %s4, %s2
  // Predicated region
  $region2: #{tpu_custom_call.1} parent=0 // pred_check
    _
  $region3: #{tpu_custom_call.1} parent=0 // pred_check_branch
    %7 = sbr.rel (0) target = $region5
  $region4: #{tpu_custom_call.1} parent=0 // pred_region
    _
  $region5: #{tpu_custom_call.1} parent=0 // pred_fallthru
    _
  %v8 = vld [vmem:[%s0] sm:$0xff]
  %v9 = vld [vmem:[%s0 + $0x8] sm:$0xff]
  %v10 = vld [vmem:[%s0 + $0x10] sm:$0xff]
  %v11 = vld [vmem:[%s0 + $0x18] sm:$0xff]
  %v12 = vld [vmem:[%s0 + $0x20] sm:$0xff]
  %v13 = vld [vmem:[%s0 + $0x28] sm:$0xff]
  %v14 = vld [vmem:[%s0 + $0x30] sm:$0xff]
  %v15 = vld [vmem:[%s0 + $0x38] sm:$0xff]
  %v16 = vld [vmem:[%s0 + $0x40] sm:$0xff]
  %v17 = vld [vmem:[%s0 + $0x48] sm:$0xff]
  %v18 = vld [vmem:[%s0 + $0x50] sm:$0xff]
  %v19 = vld [vmem:[%s0 + $0x58] sm:$0xff]
  %v20 = vld [vmem:[%s0 + $0x60] sm:$0xff]
  %v21 = vld [vmem:[%s0 + $0x68] sm:$0xff]
  %v22 = vld [vmem:[%s0 + $0x70] sm:$0xff]
  %v23 = vld [vmem:[%s0 + $0x78] sm:$0xff]
  %v24 = vmul.f32 %v8, %v8
  %v25 = vmul.f32 %v9, %v9
  %v26 = vmul.f32 %v10, %v10
  %v27 = vmul.f32 %v11, %v11
  %v28 = vmul.f32 %v12, %v12
  %v29 = vmul.f32 %v13, %v13
  %v30 = vmul.f32 %v14, %v14
  %v31 = vmul.f32 %v15, %v15
  %v32 = vmul.f32 %v16, %v16
  %v33 = vmul.f32 %v17, %v17
  %v34 = vmul.f32 %v18, %v18
  %v35 = vmul.f32 %v19, %v19
  %v36 = vmul.f32 %v20, %v20
  %v37 = vmul.f32 %v21, %v21
  %v38 = vmul.f32 %v22, %v22
  %v39 = vmul.f32 %v23, %v23
  %vm40 = vcmask 261120
  %v41 = vsel %vm40, %v24, 0.0
  %42 = vadd.xlane.f32.xlu0 %v41
  %v43 = vpop.xlane.xlu0 %42
  %v44 = vsel %vm40, %v25, 0.0
  %45 = vadd.xlane.f32.xlu0 %v44
  %v46 = vpop.xlane.xlu0 %45
  %v47 = vsel %vm40, %v26, 0.0
  %48 = vadd.xlane.f32.xlu0 %v47
  %v49 = vpop.xlane.xlu0 %48
  %v50 = vsel %vm40, %v27, 0.0
  %51 = vadd.xlane.f32.xlu0 %v50
  %v52 = vpop.xlane.xlu0 %51
  %v53 = vsel %vm40, %v28, 0.0
  %54 = vadd.xlane.f32.xlu0 %v53
  %v55 = vpop.xlane.xlu0 %54
  %v56 = vsel %vm40, %v29, 0.0
  %57 = vadd.xlane.f32.xlu0 %v56
  %v58 = vpop.xlane.xlu0 %57
  %v59 = vsel %vm40, %v30, 0.0
  %60 = vadd.xlane.f32.xlu0 %v59
  %v61 = vpop.xlane.xlu0 %60
  %v62 = vsel %vm40, %v31, 0.0
  %63 = vadd.xlane.f32.xlu0 %v62
  %v64 = vpop.xlane.xlu0 %63
  %v65 = vsel %vm40, %v32, 0.0
  %66 = vadd.xlane.f32.xlu0 %v65
  %v67 = vpop.xlane.xlu0 %66
  %v68 = vsel %vm40, %v33, 0.0
  %69 = vadd.xlane.f32.xlu0 %v68
  %v70 = vpop.xlane.xlu0 %69
  %v71 = vsel %vm40, %v34, 0.0
  %72 = vadd.xlane.f32.xlu0 %v71
  %v73 = vpop.xlane.xlu0 %72
  %v74 = vsel %vm40, %v35, 0.0
  %75 = vadd.xlane.f32.xlu0 %v74
  %v76 = vpop.xlane.xlu0 %75
  %v77 = vsel %vm40, %v36, 0.0
  %78 = vadd.xlane.f32.xlu0 %v77
  %v79 = vpop.xlane.xlu0 %78
  %v80 = vsel %vm40, %v37, 0.0
  %81 = vadd.xlane.f32.xlu0 %v80
  %v82 = vpop.xlane.xlu0 %81
  %v83 = vsel %vm40, %v38, 0.0
  %84 = vadd.xlane.f32.xlu0 %v83
  %v85 = vpop.xlane.xlu0 %84
  %v86 = vsel %vm40, %v39, 0.0
  %87 = vadd.xlane.f32.xlu0 %v86
  %v88 = vpop.xlane.xlu0 %87
  %v89 = vmax.f32 %v43, 1e-24
  %v90 = vmax.f32 %v46, 1e-24
  %v91 = vmax.f32 %v49, 1e-24
  %v92 = vmax.f32 %v52, 1e-24
  %v93 = vmax.f32 %v55, 1e-24
  %v94 = vmax.f32 %v58, 1e-24
  %v95 = vmax.f32 %v61, 1e-24
  %v96 = vmax.f32 %v64, 1e-24
  %v97 = vmax.f32 %v67, 1e-24
  %v98 = vmax.f32 %v70, 1e-24
  %v99 = vmax.f32 %v73, 1e-24
  %v100 = vmax.f32 %v76, 1e-24
  %v101 = vmax.f32 %v79, 1e-24
  %v102 = vmax.f32 %v82, 1e-24
  %v103 = vmax.f32 %v85, 1e-24
  %v104 = vmax.f32 %v88, 1e-24
  %v105 = vrsqrt.pop %v89
  %v106 = vmul.f32 %v105, %v89
  %v107 = vmul.f32 %v106, %v105
  %v108 = vmul.f32 0.5, %v107
  %v109 = vsub.f32 1.5, %v108
  %v110 = vmul.f32 %v105, %v109
  %vm111 = vweird.f32 %v89
  %vm112 = vweird.f32 %v105
  %vm113 = vmor %vm111, %vm112
  %v114 = vsel %vm113, %v105, %v110
  %v115 = vrsqrt.pop %v90
  %v116 = vmul.f32 %v115, %v90
  %v117 = vmul.f32 %v116, %v115
  %v118 = vmul.f32 0.5, %v117
  %v119 = vsub.f32 1.5, %v118
  %v120 = vmul.f32 %v115, %v119
  %vm121 = vweird.f32 %v90
  %vm122 = vweird.f32 %v115
  %vm123 = vmor %vm121, %vm122
  %v124 = vsel %vm123, %v115, %v120
  %v125 = vrsqrt.pop %v91
  %v126 = vmul.f32 %v125, %v91
  %v127 = vmul.f32 %v126, %v125
  %v128 = vmul.f32 0.5, %v127
  %v129 = vsub.f32 1.5, %v128
  %v130 = vmul.f32 %v125, %v129
  %vm131 = vweird.f32 %v91
  %vm132 = vweird.f32 %v125
  %vm133 = vmor %vm131, %vm132
  %v134 = vsel %vm133, %v125, %v130
  %v135 = vrsqrt.pop %v92
  %v136 = vmul.f32 %v135, %v92
  %v137 = vmul.f32 %v136, %v135
  %v138 = vmul.f32 0.5, %v137
  %v139 = vsub.f32 1.5, %v138
  %v140 = vmul.f32 %v135, %v139
  %vm141 = vweird.f32 %v92
  %vm142 = vweird.f32 %v135
  %vm143 = vmor %vm141, %vm142
  %v144 = vsel %vm143, %v135, %v140
  %v145 = vrsqrt.pop %v93
  %v146 = vmul.f32 %v145, %v93
  %v147 = vmul.f32 %v146, %v145
  %v148 = vmul.f32 0.5, %v147
  %v149 = vsub.f32 1.5, %v148
  %v150 = vmul.f32 %v145, %v149
  %vm151 = vweird.f32 %v93
  %vm152 = vweird.f32 %v145
  %vm153 = vmor %vm151, %vm152
  %v154 = vsel %vm153, %v145, %v150
  %v155 = vrsqrt.pop %v94
  %v156 = vmul.f32 %v155, %v94
  %v157 = vmul.f32 %v156, %v155
  %v158 = vmul.f32 0.5, %v157
  %v159 = vsub.f32 1.5, %v158
  %v160 = vmul.f32 %v155, %v159
  %vm161 = vweird.f32 %v94
  %vm162 = vweird.f32 %v155
  %vm163 = vmor %vm161, %vm162
  %v164 = vsel %vm163, %v155, %v160
  %v165 = vrsqrt.pop %v95
  %v166 = vmul.f32 %v165, %v95
  %v167 = vmul.f32 %v166, %v165
  %v168 = vmul.f32 0.5, %v167
  %v169 = vsub.f32 1.5, %v168
  %v170 = vmul.f32 %v165, %v169
  %vm171 = vweird.f32 %v95
  %vm172 = vweird.f32 %v165
  %vm173 = vmor %vm171, %vm172
  %v174 = vsel %vm173, %v165, %v170
  %v175 = vrsqrt.pop %v96
  %v176 = vmul.f32 %v175, %v96
  %v177 = vmul.f32 %v176, %v175
  %v178 = vmul.f32 0.5, %v177
  %v179 = vsub.f32 1.5, %v178
  %v180 = vmul.f32 %v175, %v179
  %vm181 = vweird.f32 %v96
  %vm182 = vweird.f32 %v175
  %vm183 = vmor %vm181, %vm182
  %v184 = vsel %vm183, %v175, %v180
  %v185 = vrsqrt.pop %v97
  %v186 = vmul.f32 %v185, %v97
  %v187 = vmul.f32 %v186, %v185
  %v188 = vmul.f32 0.5, %v187
  %v189 = vsub.f32 1.5, %v188
  %v190 = vmul.f32 %v185, %v189
  %vm191 = vweird.f32 %v97
  %vm192 = vweird.f32 %v185
  %vm193 = vmor %vm191, %vm192
  %v194 = vsel %vm193, %v185, %v190
  %v195 = vrsqrt.pop %v98
  %v196 = vmul.f32 %v195, %v98
  %v197 = vmul.f32 %v196, %v195
  %v198 = vmul.f32 0.5, %v197
  %v199 = vsub.f32 1.5, %v198
  %v200 = vmul.f32 %v195, %v199
  %vm201 = vweird.f32 %v98
  %vm202 = vweird.f32 %v195
  %vm203 = vmor %vm201, %vm202
  %v204 = vsel %vm203, %v195, %v200
  %v205 = vrsqrt.pop %v99
  %v206 = vmul.f32 %v205, %v99
  %v207 = vmul.f32 %v206, %v205
  %v208 = vmul.f32 0.5, %v207
  %v209 = vsub.f32 1.5, %v208
  %v210 = vmul.f32 %v205, %v209
  %vm211 = vweird.f32 %v99
  %vm212 = vweird.f32 %v205
  %vm213 = vmor %vm211, %vm212
  %v214 = vsel %vm213, %v205, %v210
  %v215 = vrsqrt.pop %v100
  %v216 = vmul.f32 %v215, %v100
  %v217 = vmul.f32 %v216, %v215
  %v218 = vmul.f32 0.5, %v217
  %v219 = vsub.f32 1.5, %v218
  %v220 = vmul.f32 %v215, %v219
  %vm221 = vweird.f32 %v100
  %vm222 = vweird.f32 %v215
  %vm223 = vmor %vm221, %vm222
  %v224 = vsel %vm223, %v215, %v220
  %v225 = vrsqrt.pop %v101
  %v226 = vmul.f32 %v225, %v101
  %v227 = vmul.f32 %v226, %v225
  %v228 = vmul.f32 0.5, %v227
  %v229 = vsub.f32 1.5, %v228
  %v230 = vmul.f32 %v225, %v229
  %vm231 = vweird.f32 %v101
  %vm232 = vweird.f32 %v225
  %vm233 = vmor %vm231, %vm232
  %v234 = vsel %vm233, %v225, %v230
  %v235 = vrsqrt.pop %v102
  %v236 = vmul.f32 %v235, %v102
  %v237 = vmul.f32 %v236, %v235
  %v238 = vmul.f32 0.5, %v237
  %v239 = vsub.f32 1.5, %v238
  %v240 = vmul.f32 %v235, %v239
  %vm241 = vweird.f32 %v102
  %vm242 = vweird.f32 %v235
  %vm243 = vmor %vm241, %vm242
  %v244 = vsel %vm243, %v235, %v240
  %v245 = vrsqrt.pop %v103
  %v246 = vmul.f32 %v245, %v103
  %v247 = vmul.f32 %v246, %v245
  %v248 = vmul.f32 0.5, %v247
  %v249 = vsub.f32 1.5, %v248
  %v250 = vmul.f32 %v245, %v249
  %vm251 = vweird.f32 %v103
  %vm252 = vweird.f32 %v245
  %vm253 = vmor %vm251, %vm252
  %v254 = vsel %vm253, %v245, %v250
  %v255 = vrsqrt.pop %v104
  %v256 = vmul.f32 %v255, %v104
  %v257 = vmul.f32 %v256, %v255
  %v258 = vmul.f32 0.5, %v257
  %v259 = vsub.f32 1.5, %v258
  %v260 = vmul.f32 %v255, %v259
  %vm261 = vweird.f32 %v104
  %vm262 = vweird.f32 %v255
  %vm263 = vmor %vm261, %vm262
  %v264 = vsel %vm263, %v255, %v260
  %v265 = vmul.f32 %v8, %v114
  %v266 = vmul.f32 %v9, %v124
  %v267 = vmul.f32 %v10, %v134
  %v268 = vmul.f32 %v11, %v144
  %v269 = vmul.f32 %v12, %v154
  %v270 = vmul.f32 %v13, %v164
  %v271 = vmul.f32 %v14, %v174
  %v272 = vmul.f32 %v15, %v184
  %v273 = vmul.f32 %v16, %v194
  %v274 = vmul.f32 %v17, %v204
  %v275 = vmul.f32 %v18, %v214
  %v276 = vmul.f32 %v19, %v224
  %v277 = vmul.f32 %v20, %v234
  %v278 = vmul.f32 %v21, %v244
  %v279 = vmul.f32 %v22, %v254
  %v280 = vmul.f32 %v23, %v264
  %281 = vst.msk [vmem:[%s1] sm:$0xff] %vm40, %v265
  %282 = vst.msk [vmem:[%s1 + $0x8] sm:$0xff] %vm40, %v266
  %283 = vst.msk [vmem:[%s1 + $0x10] sm:$0xff] %vm40, %v267
  %284 = vst.msk [vmem:[%s1 + $0x18] sm:$0xff] %vm40, %v268
  %285 = vst.msk [vmem:[%s1 + $0x20] sm:$0xff] %vm40, %v269
  %286 = vst.msk [vmem:[%s1 + $0x28] sm:$0xff] %vm40, %v270
  %287 = vst.msk [vmem:[%s1 + $0x30] sm:$0xff] %vm40, %v271
  %288 = vst.msk [vmem:[%s1 + $0x38] sm:$0xff] %vm40, %v272
  %289 = vst.msk [vmem:[%s1 + $0x40] sm:$0xff] %vm40, %v273
  %290 = vst.msk [vmem:[%s1 + $0x48] sm:$0xff] %vm40, %v274
  %291 = vst.msk [vmem:[%s1 + $0x50] sm:$0xff] %vm40, %v275
  %292 = vst.msk [vmem:[%s1 + $0x58] sm:$0xff] %vm40, %v276
  %293 = vst.msk [vmem:[%s1 + $0x60] sm:$0xff] %vm40, %v277
  %294 = vst.msk [vmem:[%s1 + $0x68] sm:$0xff] %vm40, %v278
  %295 = vst.msk [vmem:[%s1 + $0x70] sm:$0xff] %vm40, %v279
  %296 = vst.msk [vmem:[%s1 + $0x78] sm:$0xff] %vm40, %v280
  // Predicated region
  $region6: #{tpu_custom_call.1} parent=0 // pred_check
    _
  $region7: #{tpu_custom_call.1} parent=0 // pred_check_branch
    %298 = sbr.rel (0) target = $region9
  $region8: #{tpu_custom_call.1} parent=0 // pred_region
    _
  $region9: #{tpu_custom_call.1} parent=0 // pred_fallthru
    _
  // Predicated region
  $region10: #{tpu_custom_call.1} parent=0 // pred_check
    _
  $region11: #{tpu_custom_call.1} parent=0 // pred_check_branch
    %300 = sbr.rel (0) target = $region13
  $region12: #{tpu_custom_call.1} parent=0 // pred_region
    _
  $region13: #{tpu_custom_call.1} parent=0 // pred_fallthru
    _

</llo_original>
